<compile_context>
chip_gen: v6e
topology: v6e:2x2x1
jax: 0.10.0
libtpu: 0.0.40
codegen_flags: <defaults>
</compile_context>

<pallas_src>
import functools

import jax
import jax.numpy as jnp
from jax.experimental import pallas as pl
from jax.experimental.pallas import tpu as pltpu


def _fc_embed_kernel(x_ref, w_ref, b_ref, o_ref):
    # MXU matmul with f32 accumulation, then f32 bias + ReLU on the VPU.
    acc = jnp.dot(x_ref[...], w_ref[...], preferred_element_type=jnp.float32)
    o_ref[...] = jnp.maximum(acc + b_ref[...], 0.0).astype(o_ref.dtype)


def _fc_embed_kernel_ksplit(x_ref, w_ref, b_ref, o_ref, acc_ref):
    # K-split variant: accumulate partial products across the trailing
    # "arbitrary" grid axis; bias + ReLU + store only on the last K step.
    @pl.when(pl.program_id(1) == 0)
    def _():
        acc_ref[...] = jnp.zeros_like(acc_ref)

    acc_ref[...] += jnp.dot(x_ref[...], w_ref[...],
                            preferred_element_type=jnp.float32)

    @pl.when(pl.program_id(1) == pl.num_programs(1) - 1)
    def _():
        o_ref[...] = jnp.maximum(acc_ref[...] + b_ref[...], 0.0
                                 ).astype(o_ref.dtype)


def _round_up(x, m):
    return (x + m - 1) // m * m


def _padded_tile_bytes(rows, cols, dtype):
    """VMEM footprint of a (rows, cols) tile after (sublane, 128-lane) padding."""
    itemsize = jnp.dtype(dtype).itemsize
    sublane = max(8, 32 // itemsize)          # f32: 8, bf16: 16, int8/fp8: 32
    return _round_up(rows, sublane) * _round_up(cols, 128) * itemsize


def _tpu_vmem_info():
    """Returns (vmem_capacity_bytes, query_succeeded).

    Conservative 64-MiB fallback (safe on every generation) when the query is
    unavailable; generation-specific knobs (Buffered(1), even-grid) are only
    enabled when the query *succeeds*.
    """
    try:
        info = pltpu.get_tpu_info()
        cap = int(getattr(info, "vmem_capacity_bytes", 0) or 0)
        if cap > 0:
            return cap, True
    except Exception:
        pass
    return 64 << 20, False


@functools.partial(jax.jit, static_argnames=("block_m", "block_k", "out_dtype"))
def fully_connected_embed(x, w, b, *, block_m=None, block_k=None, out_dtype=None):
    """ReLU(x @ w + b); dropout is identity (eval mode).

    x: (batch, N, nin) -- consumed in its own dtype (store bf16 upstream for the
       bandwidth win; the wrapper never casts x).
    w: (nin, nout) (torch weight transposed); b: (nout,).
    block_m: rows per grid step; None -> sized from a per-generation VMEM byte
       budget (~14 MiB x-tile on v5e/v6e, ~8 MiB on v7x).
    block_k: optional contraction split (multiple of 128 dividing nin); None ->
       auto-enabled only when a full-nin row tile would force block_m < 256.
    """
    batch, seq, nin = x.shape
    nout = w.shape[1]
    m = batch * seq

    odt = jnp.dtype(out_dtype) if out_dtype is not None else x.dtype
    x_item = jnp.dtype(x.dtype).itemsize
    sublane = max(8, 32 // x_item)            # 8 for f32, 16 for bf16

    x2d = x.reshape(m, nin)                   # NO dtype cast of x (see header)
    w2d = w if w.dtype == x.dtype else w.astype(x.dtype)        # tiny
    b2d = b.reshape(1, nout).astype(jnp.float32)                # bias in f32

    # --- generation-aware budgets --------------------------------------------
    vmem_cap, cap_known = _tpu_vmem_info()
    is_v7x = cap_known and vmem_cap <= (96 << 20)     # 64-MiB-per-core class
    x_tile_budget = min(14 << 20, vmem_cap // 8)      # ~14 MiB v5e/v6e, ~8 MiB v7x
    vmem_ceiling = int(0.85 * vmem_cap)               # leave Mosaic headroom

    # --- contraction-split guard ----------------------------------------------
    full_row_bytes = _round_up(nin, 128) * x_item
    if block_k is None:
        if nin >= 1024 and (x_tile_budget // full_row_bytes) < 256:
            # Full-nin rows would force tiny, overhead-dominated M tiles; pick
            # the largest block_k (multiple of 128, <= 4096) dividing nin.
            for cand in range(4096, 0, -128):
                if nin % cand == 0:
                    block_k = cand
                    break
            # TODO(synk): if nin has no multiple-of-128 divisor, zero-pad x / W
            # along K in the wrapper before enabling the split; falls back to a
            # single-K grid (smaller M tiles) until then.
    else:
        if nin % block_k != 0 or (block_k % 128 != 0 and block_k != nin):
            raise ValueError("block_k must divide nin and be a multiple of 128")
    ksplit = block_k is not None and block_k < nin
    k_cols = block_k if ksplit else nin

    # --- M tile: sized by bytes, not a fixed row count ------------------------
    row_bytes = _round_up(k_cols, 128) * x_item
    if block_m is None:
        block_m_eff = max(sublane,
                          (x_tile_budget // row_bytes) // sublane * sublane)
    else:
        block_m_eff = max(sublane, (block_m // sublane) * sublane)
    block_m_eff = min(block_m_eff, _round_up(m, sublane))

    # v7x: keep >= 2 grid steps (feed both TensorCores) and prefer an even count.
    if is_v7x and m >= 2 * sublane:
        if block_m_eff >= m:
            block_m_eff = max(sublane, _round_up(pl.cdiv(m, 2), sublane))
        steps = pl.cdiv(m, block_m_eff)
        if steps > 1 and steps % 2 == 1:
            cand = max(sublane, _round_up(pl.cdiv(m, steps + 1), sublane))
            if pl.cdiv(m, cand) % 2 == 0:
                block_m_eff = cand
    grid_m = pl.cdiv(m, block_m_eff)

    # Grid-invariant W / bias: single-buffer on v7x to reclaim their 2nd buffer.
    inv_kwargs = ({"pipeline_mode": pl.Buffered(1)}
                  if (is_v7x and not ksplit) else {})

    # Scoped-VMEM budget from padded tile footprints, clamped per generation.
    est = (2 * _padded_tile_bytes(block_m_eff, k_cols, x.dtype)
           + 2 * _padded_tile_bytes(block_m_eff, nout, odt)
           + 2 * _padded_tile_bytes(k_cols, nout, w2d.dtype)
           + 2 * _padded_tile_bytes(1, nout, jnp.float32))
    if ksplit:
        est += _padded_tile_bytes(block_m_eff, nout, jnp.float32)
    vmem_limit = int(min(max(est + est // 2 + (2 << 20), 16 << 20), vmem_ceiling))

    # Accurate now that there is no wrapper-side x cast pass.
    cost = pl.CostEstimate(
        flops=2 * m * nin * nout,
        transcendentals=0,
        bytes_accessed=(m * nin * x_item
                        + nin * nout * jnp.dtype(w2d.dtype).itemsize
                        + nout * 4
                        + m * nout * jnp.dtype(odt).itemsize),
    )

    if not ksplit:
        grid = (grid_m,)
        in_specs = [
            pl.BlockSpec((block_m_eff, nin), lambda i: (i, 0)),
            pl.BlockSpec((nin, nout), lambda i: (0, 0), **inv_kwargs),
            pl.BlockSpec((1, nout), lambda i: (0, 0), **inv_kwargs),
        ]
        out_specs = pl.BlockSpec((block_m_eff, nout), lambda i: (i, 0))
        scratch = []
        kernel = _fc_embed_kernel
        dim_sem = ("parallel",)
    else:
        grid = (grid_m, nin // block_k)       # reduction axis last
        in_specs = [
            pl.BlockSpec((block_m_eff, block_k), lambda i, k: (i, k)),
            pl.BlockSpec((block_k, nout), lambda i, k: (k, 0)),
            pl.BlockSpec((1, nout), lambda i, k: (0, 0)),
        ]
        out_specs = pl.BlockSpec((block_m_eff, nout), lambda i, k: (i, 0))
        scratch = [pltpu.VMEM((block_m_eff, nout), jnp.float32)]
        kernel = _fc_embed_kernel_ksplit
        dim_sem = ("parallel", "arbitrary")

    out2d = pl.pallas_call(
        kernel,
        out_shape=jax.ShapeDtypeStruct((m, nout), odt),
        grid_spec=pltpu.PrefetchScalarGridSpec(
            num_scalar_prefetch=0,
            grid=grid,
            in_specs=in_specs,
            out_specs=out_specs,
            scratch_shapes=scratch,
        ),
        compiler_params=pltpu.CompilerParams(
            dimension_semantics=dim_sem,
            vmem_limit_bytes=vmem_limit,
        ),
        cost_estimate=cost,
    )(x2d, w2d, b2d)

    return out2d.reshape(batch, seq, nout)


def _reference(x, w, b):
    return jax.nn.relu(jnp.einsum("bnd,de->bne", x.astype(jnp.float32), w) + b)


if __name__ == "__main__":
    # Small shapes consistent with the module: batch=2, seq N=8,
    # nin (language-model dim) = 32, nout (projection dim) = 16.
    batch, seq, nin, nout = 2, 8, 32, 16

    key = jax.random.PRNGKey(0)
    kx, kw, kb, kx2 = jax.random.split(key, 4)

    x = jax.random.normal(kx, (batch, seq, nin), dtype=jnp.float32)
    # Deterministic "Linear" params (Kaiming-uniform-ish scale, synthetic).
    bound = 1.0 / (nin ** 0.5)
    w = jax.random.uniform(kw, (nin, nout), jnp.float32, -bound, bound)
    b = jax.random.uniform(kb, (nout,), jnp.float32, -bound, bound)

    # 1) f32 path, byte-budgeted auto tiling.
    out = jax.block_until_ready(fully_connected_embed(x, w, b))
    assert out.shape == (batch, seq, nout)
    assert jnp.allclose(out, _reference(x, w, b), atol=1e-5, rtol=1e-5)

    # 2) Ragged tail + multi-step grid (explicit small block_m; cdiv grid and
    #    partial-block masking handle the 59-row tail).
    xr = jax.random.normal(kx2, (3, 41, nin), dtype=jnp.float32)
    out_r = jax.block_until_ready(fully_connected_embed(xr, w, b, block_m=64))
    assert out_r.shape == (3, 41, nout)
    assert jnp.allclose(out_r, _reference(xr, w, b), atol=1e-5, rtol=1e-5)

    # 3) K-split (accumulator) path: explicit block_k on a wider nin, combined
    #    with a ragged M tail (exercises init/finalize + masked final store).
    nin_k = 256
    wk = jax.random.uniform(kw, (nin_k, nout), jnp.float32, -bound, bound)
    xk = jax.random.normal(kx, (3, 41, nin_k), dtype=jnp.float32)
    out_k = jax.block_until_ready(
        fully_connected_embed(xk, wk, b, block_m=64, block_k=128))
    assert out_k.shape == (3, 41, nout)
    assert jnp.allclose(out_k, _reference(xk, wk, b), atol=1e-4, rtol=1e-4)

    # 4) bf16-resident x: the only supported bf16 path (x already stored bf16
    #    upstream; the wrapper never casts x). w/b cast inside the wrapper.
    x_bf16 = x.astype(jnp.bfloat16)
    out_bf16 = jax.block_until_ready(
        fully_connected_embed(x_bf16, w, b, out_dtype=jnp.float32))
    assert out_bf16.shape == (batch, seq, nout)
    assert jnp.allclose(out_bf16, _reference(x, w, b), atol=3e-2, rtol=3e-2)

    print("KERNEL_OK")
</pallas_src>

<mosaic_0001>
module attributes {stable_mosaic.version = 11 : i64} {
  func.func @_fc_embed_kernel(%arg0: i32, %arg1: memref<16x32xf32, #tpu.memory_space<vmem>>, %arg2: memref<32x16xf32, #tpu.memory_space<vmem>>, %arg3: memref<1x16xf32, #tpu.memory_space<vmem>>, %arg4: memref<16x16xf32, #tpu.memory_space<vmem>>) attributes {dimension_semantics = [#tpu.dimension_semantics<parallel>], iteration_bounds = array<i64: 1>, scalar_prefetch = 0 : i64, scratch_operands = 0 : i64, tpu.core_type = #tpu.core_type<tc>, window_params = [{transform_indices = @transform_0, window_bounds = array<i64: 16, 32>}, {pipeline_mode = #tpu.pipeline_mode<synchronous>, transform_indices = @transform_1, window_bounds = array<i64: 32, 16>}, {pipeline_mode = #tpu.pipeline_mode<synchronous>, transform_indices = @transform_2, window_bounds = array<i64: 1, 16>}, {transform_indices = @transform_3, window_bounds = array<i64: 16, 16>}]} {
    %c0 = arith.constant 0 : index
    %c0_0 = arith.constant 0 : index
    %0 = vector.load %arg1[%c0, %c0_0] : memref<16x32xf32, #tpu.memory_space<vmem>>, vector<16x32xf32>
    %c0_1 = arith.constant 0 : index
    %c0_2 = arith.constant 0 : index
    %1 = vector.load %arg2[%c0_1, %c0_2] : memref<32x16xf32, #tpu.memory_space<vmem>>, vector<32x16xf32>
    %cst = arith.constant dense<0.000000e+00> : vector<16x16xf32>
    %2 = tpu.matmul %0, %1, %cst {dimension_numbers = #tpu.dot_dimension_numbers<[1], [0], [0], [1], [0, 0, 1, 1], [], []>} : vector<16x32xf32>, vector<32x16xf32>, vector<16x16xf32> -> vector<16x16xf32>
    %c0_3 = arith.constant 0 : index
    %c0_4 = arith.constant 0 : index
    %3 = vector.load %arg3[%c0_3, %c0_4] : memref<1x16xf32, #tpu.memory_space<vmem>>, vector<1x16xf32>
    %4 = vector.broadcast %3 : vector<1x16xf32> to vector<16x16xf32>
    %5 = arith.addf %2, %4 : vector<16x16xf32>
    %cst_5 = arith.constant 0.000000e+00 : f32
    %6 = vector.broadcast %cst_5 : f32 to vector<16x16xf32>
    %7 = arith.maximumf %5, %6 : vector<16x16xf32>
    %c0_6 = arith.constant 0 : index
    %c0_7 = arith.constant 0 : index
    %8 = vector.load %arg4[%c0_6, %c0_7] : memref<16x16xf32, #tpu.memory_space<vmem>>, vector<16x16xf32>
    tpu.vector_store %arg4[%c0_6, %c0_7], %7 {strides = array<i32>} : memref<16x16xf32, #tpu.memory_space<vmem>>, vector<16x16xf32>,
    return
  }
  func.func @transform_0(%arg0: i32) -> (i32, i32) {
    %c0_i32 = arith.constant 0 : i32
    %c0_i32_0 = arith.constant 0 : i32
    return %arg0, %c0_i32 : i32, i32
  }
  func.func @transform_1(%arg0: i32) -> (i32, i32) {
    %c0_i32 = arith.constant 0 : i32
    %c0_i32_0 = arith.constant 0 : i32
    %c0_i32_1 = arith.constant 0 : i32
    return %c0_i32, %c0_i32_0 : i32, i32
  }
  func.func @transform_2(%arg0: i32) -> (i32, i32) {
    %c0_i32 = arith.constant 0 : i32
    %c0_i32_0 = arith.constant 0 : i32
    %c0_i32_1 = arith.constant 0 : i32
    return %c0_i32, %c0_i32_0 : i32, i32
  }
  func.func @transform_3(%arg0: i32) -> (i32, i32) {
    %c0_i32 = arith.constant 0 : i32
    %c0_i32_0 = arith.constant 0 : i32
    return %arg0, %c0_i32 : i32, i32
  }
}

</mosaic_0001>

<llo_original>
// kernel: fully_connected_embed.1
$region0: #{fully_connected_embed.1}
  #allocation0 [shape = 'u32[]', space=smem, size = 0x4, offset = 0x4, fixed_abs, tag = 'smem constant byte address 0x4 - core index']
  #allocation1 [shape = 'u32[144,128]{1,0:T(1,128)}', space=vmem, size = 0x12000, scoped, tag = 'internal scratch']
  %s0 = inlined_call_operand.vmem [shape: f32[16,32], index: 0, kind: input, shape index: {}]
  %s1 = inlined_call_operand.vmem [shape: f32[32,16], index: 1, kind: input, shape index: {}]
  %s2 = inlined_call_operand.vmem [shape: f32[1,16], index: 2, kind: input, shape index: {}]
  %s3 = inlined_call_operand.hbm [shape: f32[16,16], index: 3, kind: output, shape index: {}]
  %s4 = sld [smem:[#allocation0]]
  $region22: #{fully_connected_embed.1} parent=0
    _
  %s6 = ssub.s32 1, %s4
  %s7 = scalar_select 0, %s6, %s4
  $region1: #{fully_connected_embed.1} parent=0
    #allocation2 [shape = 'u8[8192]{0}', space=vmem, size = 0x2000, scoped, tag = 'output window, operand 0, single buffered']
    #allocation3 [shape = 's32[1]{0}', space=sflag, size = 0x4, scoped, tag = 'scoped memory for fully_connected_embed.1']
    %8 = vsyncpa [#allocation3], 0
    // Predicated region
    $region2: #{fully_connected_embed.1} parent=1 // pred_check
      _
    $region3: #{fully_connected_embed.1} parent=1 // pred_check_branch
      %10 = sbr.rel (0) target = $region5
    $region4: #{fully_connected_embed.1} parent=1 // pred_region
      _
    $region5: #{fully_connected_embed.1} parent=1 // pred_fallthru
      _
    // Predicated region
    $region6: #{fully_connected_embed.1} parent=1 // pred_check
      _
    $region7: #{fully_connected_embed.1} parent=1 // pred_check_branch
      %12 = sbr.rel (0) target = $region9
    $region8: #{fully_connected_embed.1} parent=1 // pred_region
      _
    $region9: #{fully_connected_embed.1} parent=1 // pred_fallthru
      _
    // Predicated region
    $region10: #{fully_connected_embed.1} parent=1 // pred_check
      _
    $region11: #{fully_connected_embed.1} parent=1 // pred_check_branch
      %14 = sbr.rel (0) target = $region13
    $region12: #{fully_connected_embed.1} parent=1 // pred_region
      _
    $region13: #{fully_connected_embed.1} parent=1 // pred_fallthru
      _
    %v15 = vld [vmem:[%s0] sm:$0xff]
    %v16 = vld [vmem:[%s0 + $0x8] sm:$0xff]
    %v17 = vld [vmem:[%s1] sm:$0xff]
    %v18 = vld [vmem:[%s1 + $0x8] sm:$0xff]
    %v19 = vld [vmem:[%s1 + $0x10] sm:$0xff]
    %v20 = vld [vmem:[%s1 + $0x18] sm:$0xff]
    %v21 = vld [vmem:[%s2] sm:$0x1]
    %v23 = vlaneseq
    %v24 = vshrl.u32 %v23, 7
    %v25 = vsub.s32 0, %v24
    %v26 = vrot.slane %v21, %v25
    %vm28 = vcmask 261120
    %v30 = vsel %vm28, %v15, 0
    %v33 = vsel %vm28, %v16, 0
    %35 = vmatprep.subr.mxu0 0.0
    %36 = vmatpush1.msra.mxu0 0.0
    %37 = vmatprep.subr.mxu0 0.0
    %38 = vmatpush1.msra.mxu0 0.0
    %39 = vmatprep.subr.mxu0 0.0
    %40 = vmatpush1.msra.mxu0 0.0
    %41 = vmatprep.subr.mxu0 0.0
    %42 = vmatpush1.msra.mxu0 0.0
    %43 = vmatprep.subr.mxu0 0.0
    %44 = vmatpush1.msra.mxu0 0.0
    %45 = vmatprep.subr.mxu0 0.0
    %46 = vmatpush1.msra.mxu0 0.0
    %47 = vmatprep.subr.mxu0 0.0
    %48 = vmatpush1.msra.mxu0 0.0
    %49 = vmatprep.subr.mxu0 0.0
    %50 = vmatpush1.msra.mxu0 0.0
    %51 = vmatprep.subr.mxu0 0.0
    %52 = vmatpush1.msra.mxu0 0.0
    %53 = vmatprep.subr.mxu0 0.0
    %54 = vmatpush1.msra.mxu0 0.0
    %55 = vmatprep.subr.mxu0 0.0
    %56 = vmatpush1.msra.mxu0 0.0
    %57 = vmatprep.subr.mxu0 0.0
    %58 = vmatpush1.msra.mxu0 0.0
    %59 = vmatprep.subr.mxu0 0.0
    %60 = vmatpush1.msra.mxu0 %v20
    %61 = vmatprep.subr.mxu0 0.0
    %62 = vmatpush1.msra.mxu0 %v19
    %63 = vmatprep.subr.mxu0 0.0
    %64 = vmatpush1.msra.mxu0 %v18
    %65 = vmatprep.subr.mxu0 0.0
    %66 = vmatpush1.msra.mxu0 %v17
    %67 = vmatprep.subr.mxu0 0.0
    %68 = vmatpush2.msra.mxu0 0.0
    %69 = vmatprep.subr.mxu0 0.0
    %70 = vmatpush2.msra.mxu0 0.0
    %71 = vmatprep.subr.mxu0 0.0
    %72 = vmatpush2.msra.mxu0 0.0
    %73 = vmatprep.subr.mxu0 0.0
    %74 = vmatpush2.msra.mxu0 0.0
    %75 = vmatprep.subr.mxu0 0.0
    %76 = vmatpush2.msra.mxu0 0.0
    %77 = vmatprep.subr.mxu0 0.0
    %78 = vmatpush2.msra.mxu0 0.0
    %79 = vmatprep.subr.mxu0 0.0
    %80 = vmatpush2.msra.mxu0 0.0
    %81 = vmatprep.subr.mxu0 0.0
    %82 = vmatpush2.msra.mxu0 0.0
    %83 = vmatprep.subr.mxu0 0.0
    %84 = vmatpush2.msra.mxu0 0.0
    %85 = vmatprep.subr.mxu0 0.0
    %86 = vmatpush2.msra.mxu0 0.0
    %87 = vmatprep.subr.mxu0 0.0
    %88 = vmatpush2.msra.mxu0 0.0
    %89 = vmatprep.subr.mxu0 0.0
    %90 = vmatpush2.msra.mxu0 0.0
    %91 = vmatprep.subr.mxu0 0.0
    %92 = vmatpush2.msra.mxu0 0.0
    %93 = vmatprep.subr.mxu0 0.0
    %94 = vmatpush2.msra.mxu0 0.0
    %95 = vmatprep.subr.mxu0 0.0
    %96 = vmatpush2.msra.mxu0 0.0
    %97 = vmatprep.subr.mxu0 0.0
    %98 = vmatpush2.msra.mxu0 0.0
    %99 = vmatprep.mubr.f32.mxu0 0.0
    %100 = vmatmul.mubr.f32.gmra.mxu0 %v30
    %v101 = vpop.f32.mrf.mxu0
    %v102 = vadd.f32 %v26, %v101
    %v103 = vpop.f32.mrf.mxu0
    %104 = vmatprep.mubr.f32.mxu0 0.0
    %105 = vmatmul.mubr.f32.gmra.mxu0 %v33
    %v106 = vpop.f32.mrf.mxu0
    %v107 = vadd.f32 %v26, %v106
    %v108 = vpop.f32.mrf.mxu0
    %109 = vdwg.mxu0
    %v110 = vmax.f32 %v102, 0.0
    %v111 = vmax.f32 %v107, 0.0
    %vm112 = vcmask 130048
    %113 = vst.msk [vmem:[#allocation2] sm:$0xff] %vm112, %v110
    %114 = vst.msk [vmem:[#allocation2 + $0x8] sm:$0xff] %vm112, %v111
    // Predicated region
    $region14: #{fully_connected_embed.1} parent=1 // pred_check
      _
    $region15: #{fully_connected_embed.1} parent=1 // pred_check_branch
      %116 = sbr.rel (0) target = $region17
    $region16: #{fully_connected_embed.1} parent=1 // pred_region
      %s118 = ssub.s32 256, 256
      %119 = vsyncadd [#allocation3], %s118
      %s120 = sshll.u32 [#allocation2], 4
      %s121 = int_to_ptr.vmem [resolvable:$true] %s120
      %126 = dma.vmem_to_hbm [thread:$0]  %s121, 256, %s3, [#allocation3], 128, 128, 8
    $region17: #{fully_connected_embed.1} parent=1 // pred_fallthru
      _
    // Predicated region
    $region18: #{fully_connected_embed.1} parent=1 // pred_check
      _
    $region19: #{fully_connected_embed.1} parent=1 // pred_check_branch
      %128 = sbr.rel (0) target = $region21
    $region20: #{fully_connected_embed.1} parent=1 // pred_region
      %129 = dma.done [#allocation3], 256
    $region21: #{fully_connected_embed.1} parent=1 // pred_fallthru
      _
    %130 = vsyncpa [#allocation3], 1

</llo_original>
